<compile_context>
chip_gen: v7x
topology: tpu7x:2x2x1
jax: 0.10.0
libtpu: 0.0.40
codegen_flags: <defaults>
</compile_context>

<pallas_src>
import jax
import jax.numpy as jnp
from jax.experimental import pallas as pl
from jax.experimental.pallas import tpu as pltpu


def uni_deep_fsmn_kernel(x_ref, w1_ref, b1_ref, w2_ref, cw_ref, o_ref, pad_ref):
    # x_ref / o_ref: (bt, tt, D) blocks.  Weights are full arrays in VMEM.
    # pad_ref: (bt, tt + L - 1, D) scratch; rows [0, L-1) hold the causal
    # zero-pad / carried tail of p1 from the previous time tile.
    bt, tt, D = x_ref.shape
    L = cw_ref.shape[0]
    t_blk = pl.program_id(1)

    # Start of each batch-block's time sweep: reset the causal pad to zero so
    # FIR state never leaks across batch blocks.
    @pl.when(t_blk == 0)
    def _():
        pad_ref[:, : L - 1, :] = jnp.zeros((bt, L - 1, D), jnp.float32)

    x = x_ref[...]                                           # (bt, tt, D)
    x2d = x.reshape(bt * tt, D)                              # merge leading dims (free)

    # hidden linear + ReLU (MXU), f32 accumulation
    f1 = jnp.maximum(
        jnp.dot(x2d, w1_ref[...], preferred_element_type=jnp.float32)
        + b1_ref[...],
        0.0,
    )                                                        # (bt*tt, H)

    # projection (no bias)
    p1 = jnp.dot(f1, w2_ref[...], preferred_element_type=jnp.float32)
    p1 = p1.reshape(bt, tt, D)                               # (bt, tt, D)

    # Write p1 after the L-1 carry rows -> pad_ref holds the causal-padded
    # signal for this tile: pad_ref[:, j, :] == p1_global[t0 + j - (L-1)]
    # (zero / carried value for j < L-1).
    pad_ref[:, L - 1 :, :] = p1

    # Depthwise causal FIR: conv[t] = sum_k cw[k] * pad[t + k]
    cw = cw_ref[...]                                         # (L, D)
    conv = cw[L - 1][None, None, :] * p1                     # k = L-1 tap is p1 itself
    for k in range(L - 1):                                   # static, unrolled
        conv = conv + cw[k][None, None, :] * pad_ref[:, k : k + tt, :]

    o_ref[...] = (x + p1 + conv).astype(o_ref.dtype)

    # Carry the last L-1 rows of this tile's p1 into the pad region for the
    # next time tile of the same batch block.
    pad_ref[:, : L - 1, :] = pad_ref[:, tt : tt + L - 1, :]


def uni_deep_fsmn(x, w1, b1, w2, cw, *, bt=None, tt=None):
    """x: (B, T, D) f32; w1: (D, H); b1: (1, H); w2: (H, D); cw: (L, D)."""
    B, T, D = x.shape
    H = w1.shape[1]
    L = cw.shape[0]
    bt = B if bt is None else bt
    tt = T if tt is None else tt
    assert B % bt == 0 and T % tt == 0, "bt/tt must divide B/T"
    assert tt % 8 == 0, "time tile must be sublane-aligned"
    assert tt >= L - 1, "time tile must cover the FIR carry"

    grid = (B // bt, T // tt)

    # Whole-array, non-pipelined VMEM residency for the (small) parameters:
    # no double buffering, no per-step DMA.
    wspec = pl.BlockSpec(memory_space=pltpu.MemorySpace.VMEM)

    flops = 4 * B * T * D * H + 2 * B * T * D * L
    bytes_accessed = 2 * B * T * D * 4 + 4 * (D * H + H + H * D + L * D)

    return pl.pallas_call(
        uni_deep_fsmn_kernel,
        out_shape=jax.ShapeDtypeStruct((B, T, D), x.dtype),
        grid=grid,
        in_specs=[
            pl.BlockSpec((bt, tt, D), lambda b, t: (b, t, 0)),
            wspec,  # w1
            wspec,  # b1
            wspec,  # w2
            wspec,  # cw
        ],
        out_specs=pl.BlockSpec((bt, tt, D), lambda b, t: (b, t, 0)),
        scratch_shapes=[pltpu.VMEM((bt, tt + L - 1, D), jnp.float32)],
        compiler_params=pltpu.CompilerParams(
            dimension_semantics=("parallel", "arbitrary"),
            vmem_limit_bytes=48 * 1024 * 1024,  # safe on v5e/v6e/v7x
        ),
        cost_estimate=pl.CostEstimate(
            flops=flops, transcendentals=0, bytes_accessed=bytes_accessed
        ),
    )(x, w1, b1, w2, cw)


def ref_forward(x, w1, b1, w2, cw):
    """Pure-JAX reference mirroring the PyTorch forward exactly."""
    B, T, D = x.shape
    L = cw.shape[0]
    f1 = jax.nn.relu(x @ w1 + b1)
    p1 = f1 @ w2
    p1_pad = jnp.concatenate([jnp.zeros((B, L - 1, D), p1.dtype), p1], axis=1)
    conv = jnp.zeros_like(p1)
    for k in range(L):
        conv = conv + cw[k][None, None, :] * p1_pad[:, k : k + T, :]
    return x + p1 + conv


if __name__ == "__main__":
    # Small shapes consistent with the module: input_dim == output_dim == D.
    # B=4 / T=32 with bt=2 / tt=16 exercises both grid axes (2 batch blocks x
    # 2 time tiles), including the carried FIR tail and its per-batch reset.
    B, T, D, H, L = 4, 32, 16, 32, 5     # batch, seq, feat, hidden, lorder

    key = jax.random.PRNGKey(0)
    kx, k1, kb, k2, kc = jax.random.split(key, 5)

    x = jax.random.normal(kx, (B, T, D), dtype=jnp.float32)

    # PyTorch parameter mapping:
    #   nn.Linear(D, H):             weight (H, D), bias (H,) -> w1 = weight.T, b1
    #   nn.Linear(H, D, bias=False): weight (D, H)            -> w2 = weight.T
    #   nn.Conv2d(D, D, [L, 1], groups=D, bias=False): weight (D, 1, L, 1)
    #                                                  -> cw[k, d] = W[d, 0, k, 0]
    w1 = jax.random.normal(k1, (D, H), dtype=jnp.float32) * 0.1
    b1 = jax.random.normal(kb, (1, H), dtype=jnp.float32) * 0.1
    w2 = jax.random.normal(k2, (H, D), dtype=jnp.float32) * 0.1
    cw = jax.random.normal(kc, (L, D), dtype=jnp.float32) * 0.1

    out = uni_deep_fsmn(x, w1, b1, w2, cw, bt=2, tt=16)
    out = jax.block_until_ready(out)

    expected = ref_forward(x, w1, b1, w2, cw)
    assert out.shape == (B, T, D)
    assert jnp.allclose(out, expected, atol=1e-4, rtol=1e-4), "mismatch vs reference"

    print("KERNEL_OK")
</pallas_src>

<mosaic_0001>
module attributes {stable_mosaic.version = 11 : i64} {
  func.func @uni_deep_fsmn_kernel(%arg0: i32, %arg1: i32, %arg2: memref<2x16x16xf32, #tpu.memory_space<vmem>>, %arg3: memref<16x32xf32, #tpu.memory_space<vmem>>, %arg4: memref<1x32xf32, #tpu.memory_space<vmem>>, %arg5: memref<32x16xf32, #tpu.memory_space<vmem>>, %arg6: memref<5x16xf32, #tpu.memory_space<vmem>>, %arg7: memref<2x16x16xf32, #tpu.memory_space<vmem>>, %arg8: memref<2x20x16xf32, #tpu.memory_space<vmem>>) attributes {dimension_semantics = [#tpu.dimension_semantics<parallel>, #tpu.dimension_semantics<arbitrary>], iteration_bounds = array<i64: 2, 2>, scalar_prefetch = 0 : i64, scratch_operands = 1 : i64, tpu.core_type = #tpu.core_type<tc>, window_params = [{transform_indices = @transform_0, window_bounds = array<i64: 2, 16, 16>}, {pipeline_mode = #tpu.pipeline_mode<synchronous>, transform_indices = @transform_1, window_bounds = array<i64: 16, 32>}, {pipeline_mode = #tpu.pipeline_mode<synchronous>, transform_indices = @transform_2, window_bounds = array<i64: 1, 32>}, {pipeline_mode = #tpu.pipeline_mode<synchronous>, transform_indices = @transform_3, window_bounds = array<i64: 32, 16>}, {pipeline_mode = #tpu.pipeline_mode<synchronous>, transform_indices = @transform_4, window_bounds = array<i64: 5, 16>}, {transform_indices = @transform_5, window_bounds = array<i64: 2, 16, 16>}]} {
    %c0_i32 = arith.constant 0 : i32
    %0 = arith.cmpi eq, %arg1, %c0_i32 : i32
    %1 = arith.extui %0 : i1 to i32
    %c0_i32_0 = arith.constant 0 : i32
    %2 = arith.cmpi ne, %1, %c0_i32_0 : i32
    scf.if %2 {
      %cst_32 = arith.constant 0.000000e+00 : f32
      %55 = vector.broadcast %cst_32 : f32 to vector<2x4x16xf32>
      %c0_33 = arith.constant 0 : index
      %c0_34 = arith.constant 0 : index
      %c0_35 = arith.constant 0 : index
      %56 = vector.load %arg8[%c0_33, %c0_34, %c0_35] : memref<2x20x16xf32, #tpu.memory_space<vmem>>, vector<2x4x16xf32>
      tpu.vector_store %arg8[%c0_33, %c0_34, %c0_35], %55 {strides = array<i32>} : memref<2x20x16xf32, #tpu.memory_space<vmem>>, vector<2x4x16xf32>,
    } else {
    }
    %c0 = arith.constant 0 : index
    %c0_1 = arith.constant 0 : index
    %c0_2 = arith.constant 0 : index
    %3 = vector.load %arg2[%c0, %c0_1, %c0_2] : memref<2x16x16xf32, #tpu.memory_space<vmem>>, vector<2x16x16xf32>
    %4 = vector.shape_cast %3 : vector<2x16x16xf32> to vector<32x16xf32>
    %c0_3 = arith.constant 0 : index
    %c0_4 = arith.constant 0 : index
    %5 = vector.load %arg3[%c0_3, %c0_4] : memref<16x32xf32, #tpu.memory_space<vmem>>, vector<16x32xf32>
    %cst = arith.constant dense<0.000000e+00> : vector<32x32xf32>
    %6 = tpu.matmul %4, %5, %cst {dimension_numbers = #tpu.dot_dimension_numbers<[1], [0], [0], [1], [0, 0, 1, 1], [], []>} : vector<32x16xf32>, vector<16x32xf32>, vector<32x32xf32> -> vector<32x32xf32>
    %c0_5 = arith.constant 0 : index
    %c0_6 = arith.constant 0 : index
    %7 = vector.load %arg4[%c0_5, %c0_6] : memref<1x32xf32, #tpu.memory_space<vmem>>, vector<1x32xf32>
    %8 = vector.broadcast %7 : vector<1x32xf32> to vector<32x32xf32>
    %9 = arith.addf %6, %8 : vector<32x32xf32>
    %cst_7 = arith.constant 0.000000e+00 : f32
    %10 = vector.broadcast %cst_7 : f32 to vector<32x32xf32>
    %11 = arith.maximumf %9, %10 : vector<32x32xf32>
    %c0_8 = arith.constant 0 : index
    %c0_9 = arith.constant 0 : index
    %12 = vector.load %arg5[%c0_8, %c0_9] : memref<32x16xf32, #tpu.memory_space<vmem>>, vector<32x16xf32>
    %cst_10 = arith.constant dense<0.000000e+00> : vector<32x16xf32>
    %13 = tpu.matmul %11, %12, %cst_10 {dimension_numbers = #tpu.dot_dimension_numbers<[1], [0], [0], [1], [0, 0, 1, 1], [], []>} : vector<32x32xf32>, vector<32x16xf32>, vector<32x16xf32> -> vector<32x16xf32>
    %14 = vector.shape_cast %13 : vector<32x16xf32> to vector<2x16x16xf32>
    %c0_11 = arith.constant 0 : index
    %c4 = arith.constant 4 : index
    %c0_12 = arith.constant 0 : index
    %15 = vector.load %arg8[%c0_11, %c4, %c0_12] : memref<2x20x16xf32, #tpu.memory_space<vmem>>, vector<2x16x16xf32>
    tpu.vector_store %arg8[%c0_11, %c4, %c0_12], %14 {strides = array<i32>} : memref<2x20x16xf32, #tpu.memory_space<vmem>>, vector<2x16x16xf32>,
    %c0_13 = arith.constant 0 : index
    %c0_14 = arith.constant 0 : index
    %16 = vector.load %arg6[%c0_13, %c0_14] : memref<5x16xf32, #tpu.memory_space<vmem>>, vector<5x16xf32>
    %17 = vector.extract_strided_slice %16 {offsets = [4, 0], sizes = [1, 16], strides = [1, 1]} : vector<5x16xf32> to vector<1x16xf32>
    %18 = vector.shape_cast %17 : vector<1x16xf32> to vector<16xf32>
    %19 = vector.shape_cast %18 : vector<16xf32> to vector<1x1x16xf32>
    %20 = vector.broadcast %19 : vector<1x1x16xf32> to vector<2x16x16xf32>
    %21 = arith.mulf %20, %14 : vector<2x16x16xf32>
    %22 = vector.extract_strided_slice %16 {offsets = [0, 0], sizes = [1, 16], strides = [1, 1]} : vector<5x16xf32> to vector<1x16xf32>
    %23 = vector.shape_cast %22 : vector<1x16xf32> to vector<16xf32>
    %24 = vector.shape_cast %23 : vector<16xf32> to vector<1x1x16xf32>
    %c0_15 = arith.constant 0 : index
    %c0_16 = arith.constant 0 : index
    %c0_17 = arith.constant 0 : index
    %25 = vector.load %arg8[%c0_15, %c0_16, %c0_17] : memref<2x20x16xf32, #tpu.memory_space<vmem>>, vector<2x16x16xf32>
    %26 = vector.broadcast %24 : vector<1x1x16xf32> to vector<2x16x16xf32>
    %27 = arith.mulf %26, %25 : vector<2x16x16xf32>
    %28 = arith.addf %21, %27 : vector<2x16x16xf32>
    %29 = vector.extract_strided_slice %16 {offsets = [1, 0], sizes = [1, 16], strides = [1, 1]} : vector<5x16xf32> to vector<1x16xf32>
    %30 = vector.shape_cast %29 : vector<1x16xf32> to vector<16xf32>
    %31 = vector.shape_cast %30 : vector<16xf32> to vector<1x1x16xf32>
    %c0_18 = arith.constant 0 : index
    %c1 = arith.constant 1 : index
    %c0_19 = arith.constant 0 : index
    %32 = vector.load %arg8[%c0_18, %c1, %c0_19] : memref<2x20x16xf32, #tpu.memory_space<vmem>>, vector<2x16x16xf32>
    %33 = vector.broadcast %31 : vector<1x1x16xf32> to vector<2x16x16xf32>
    %34 = arith.mulf %33, %32 : vector<2x16x16xf32>
    %35 = arith.addf %28, %34 : vector<2x16x16xf32>
    %36 = vector.extract_strided_slice %16 {offsets = [2, 0], sizes = [1, 16], strides = [1, 1]} : vector<5x16xf32> to vector<1x16xf32>
    %37 = vector.shape_cast %36 : vector<1x16xf32> to vector<16xf32>
    %38 = vector.shape_cast %37 : vector<16xf32> to vector<1x1x16xf32>
    %c0_20 = arith.constant 0 : index
    %c2 = arith.constant 2 : index
    %c0_21 = arith.constant 0 : index
    %39 = vector.load %arg8[%c0_20, %c2, %c0_21] : memref<2x20x16xf32, #tpu.memory_space<vmem>>, vector<2x16x16xf32>
    %40 = vector.broadcast %38 : vector<1x1x16xf32> to vector<2x16x16xf32>
    %41 = arith.mulf %40, %39 : vector<2x16x16xf32>
    %42 = arith.addf %35, %41 : vector<2x16x16xf32>
    %43 = vector.extract_strided_slice %16 {offsets = [3, 0], sizes = [1, 16], strides = [1, 1]} : vector<5x16xf32> to vector<1x16xf32>
    %44 = vector.shape_cast %43 : vector<1x16xf32> to vector<16xf32>
    %45 = vector.shape_cast %44 : vector<16xf32> to vector<1x1x16xf32>
    %c0_22 = arith.constant 0 : index
    %c3 = arith.constant 3 : index
    %c0_23 = arith.constant 0 : index
    %46 = vector.load %arg8[%c0_22, %c3, %c0_23] : memref<2x20x16xf32, #tpu.memory_space<vmem>>, vector<2x16x16xf32>
    %47 = vector.broadcast %45 : vector<1x1x16xf32> to vector<2x16x16xf32>
    %48 = arith.mulf %47, %46 : vector<2x16x16xf32>
    %49 = arith.addf %42, %48 : vector<2x16x16xf32>
    %50 = arith.addf %3, %14 : vector<2x16x16xf32>
    %51 = arith.addf %50, %49 : vector<2x16x16xf32>
    %c0_24 = arith.constant 0 : index
    %c0_25 = arith.constant 0 : index
    %c0_26 = arith.constant 0 : index
    %52 = vector.load %arg7[%c0_24, %c0_25, %c0_26] : memref<2x16x16xf32, #tpu.memory_space<vmem>>, vector<2x16x16xf32>
    tpu.vector_store %arg7[%c0_24, %c0_25, %c0_26], %51 {strides = array<i32>} : memref<2x16x16xf32, #tpu.memory_space<vmem>>, vector<2x16x16xf32>,
    %c0_27 = arith.constant 0 : index
    %c16 = arith.constant 16 : index
    %c0_28 = arith.constant 0 : index
    %53 = vector.load %arg8[%c0_27, %c16, %c0_28] : memref<2x20x16xf32, #tpu.memory_space<vmem>>, vector<2x4x16xf32>
    %c0_29 = arith.constant 0 : index
    %c0_30 = arith.constant 0 : index
    %c0_31 = arith.constant 0 : index
    %54 = vector.load %arg8[%c0_29, %c0_30, %c0_31] : memref<2x20x16xf32, #tpu.memory_space<vmem>>, vector<2x4x16xf32>
    tpu.vector_store %arg8[%c0_29, %c0_30, %c0_31], %53 {strides = array<i32>} : memref<2x20x16xf32, #tpu.memory_space<vmem>>, vector<2x4x16xf32>,
    return
  }
  func.func @transform_0(%arg0: i32, %arg1: i32) -> (i32, i32, i32) {
    %c0_i32 = arith.constant 0 : i32
    %c0_i32_0 = arith.constant 0 : i32
    return %arg0, %arg1, %c0_i32 : i32, i32, i32
  }
  func.func @transform_1(%arg0: i32, %arg1: i32) -> (i32, i32) {
    %c0_i32 = arith.constant 0 : i32
    %c0_i32_0 = arith.constant 0 : i32
    %c0_i32_1 = arith.constant 0 : i32
    return %c0_i32, %c0_i32_0 : i32, i32
  }
  func.func @transform_2(%arg0: i32, %arg1: i32) -> (i32, i32) {
    %c0_i32 = arith.constant 0 : i32
    %c0_i32_0 = arith.constant 0 : i32
    %c0_i32_1 = arith.constant 0 : i32
    return %c0_i32, %c0_i32_0 : i32, i32
  }
  func.func @transform_3(%arg0: i32, %arg1: i32) -> (i32, i32) {
    %c0_i32 = arith.constant 0 : i32
    %c0_i32_0 = arith.constant 0 : i32
    %c0_i32_1 = arith.constant 0 : i32
    return %c0_i32, %c0_i32_0 : i32, i32
  }
  func.func @transform_4(%arg0: i32, %arg1: i32) -> (i32, i32) {
    %c0_i32 = arith.constant 0 : i32
    %c0_i32_0 = arith.constant 0 : i32
    %c0_i32_1 = arith.constant 0 : i32
    return %c0_i32, %c0_i32_0 : i32, i32
  }
  func.func @transform_5(%arg0: i32, %arg1: i32) -> (i32, i32, i32) {
    %c0_i32 = arith.constant 0 : i32
    %c0_i32_0 = arith.constant 0 : i32
    return %arg0, %arg1, %c0_i32 : i32, i32, i32
  }
}

</mosaic_0001>

<llo_original>
// kernel: tpu_custom_call.1
$region0: #{tpu_custom_call.1}
  #allocation0 [shape = 'u32[]', space=smem, size = 0x4, offset = 0x4, fixed_abs, tag = 'smem constant byte address 0x4 - core index']
  #allocation1 [shape = 'u32[144,128]{1,0:T(1,128)}', space=vmem, size = 0x12000, scoped, tag = 'internal scratch']
  #allocation2 [shape = 'f32[2,20,16]{2,1,0:T(8,128)}', space=vmem, size = 0x6000, scoped, tag = 'scratch operand']
  %s0 = inlined_call_operand.vmem [shape: f32[4,32,16], index: 0, kind: input, shape index: {}]
  %s1 = inlined_call_operand.vmem [shape: f32[16,32], index: 1, kind: input, shape index: {}]
  %s2 = inlined_call_operand.vmem [shape: f32[1,32], index: 2, kind: input, shape index: {}]
  %s3 = inlined_call_operand.vmem [shape: f32[32,16], index: 3, kind: input, shape index: {}]
  %s4 = inlined_call_operand.vmem [shape: f32[5,16], index: 4, kind: input, shape index: {}]
  %s5 = inlined_call_operand.vmem [shape: f32[4,32,16], index: 5, kind: output, shape index: {}]
  %s6 = sld [smem:[#allocation0]]
  $region129: #{tpu_custom_call.1} parent=0
    _
  %s8 = ssub.s32 1, %s6
  %s9 = scalar_select 0, %s8, %s6
  $region1: #{tpu_custom_call.1} parent=0
    #allocation3 [shape = 'u8[32768]{0}', space=vmem, size = 0x8000, scoped, tag = 'input window, operand 0']
    #allocation4 [shape = 'u8[32768]{0}', space=vmem, size = 0x8000, scoped, tag = 'output window, operand 0']
    loop: start=0, step=1, limit=6
    $region2: #{tpu_custom_call.1} parent=1 // loop_pre_header
      _
    $region3: #{tpu_custom_call.1} parent=1 // loop_header
      %s11 = sphi 0, %s15
      %p12 = scmp.ge.s32.totalorder %s11, 6
      %s18 = sphi 0, %s30
      %s19 = sphi 0, %s26
      %s20 = sphi 0, %s18
      %s21 = sphi 0, %s19
      %s22 = sphi 0, %s20
      %s23 = sphi 0, %s21
      %s35 = sphi 0, %s37
      %s38 = sphi 0, %s35
      %s39 = sphi 0, %s38
      %s55 = sphi 0, %s39
      %s59 = sphi 0, %s59
      %s61 = sphi 0, %s59
      %s62 = sphi 0, %s61
      %s76 = sphi 0, %s62
      %s80 = sphi 0, %s80
      %s82 = sphi 0, %s80
      %s83 = sphi 0, %s82
      %s97 = sphi 0, %s83
      %s101 = sphi 0, %s101
      %s103 = sphi 0, %s101
      %s104 = sphi 0, %s103
      %s118 = sphi 0, %s104
      %s122 = sphi 0, %s122
      %s124 = sphi 0, %s122
      %s125 = sphi 0, %s124
      %s139 = sphi 0, %s125
      %s147 = sphi 0, %s149
      %s150 = sphi 0, %s147
      %s151 = sphi 0, %s150
      %s167 = sphi 0, %s151
    $region4: #{tpu_custom_call.1} parent=1 // loop_header_branch
      %14 = sbr.rel (%p12) target = $region8
    $region5: #{tpu_custom_call.1} parent=1 // loop_body
      %s16 = ssub.s32 %s11, 1
      %s17 = ssub.s32 %s11, 2
      %s24 = sadd.s32 1, %s19
      %p25 = scmp.ge.s32.totalorder %s24, 2
      %s26 = scalar_select %p25, 0, %s24
      %s27 = sadd.s32 1, %s18
      %s28 = scalar_select %p25, %s27, %s18
      %p29 = scmp.ge.s32.totalorder %s28, 2
      %s30 = scalar_select %p29, 0, %s28
      %s31 = ssub.s32 %s18, %s30
      %s32 = ssub.s32 %s19, %s26
      %s33 = sor.u32 %s31, %s32
      %p34 = scmp.eq.s32.totalorder %s33, 0
      %s36 = sadd.s32 %s35, 1
      %s37 = scalar_select %p34, %s35, %s36
      %p40 = pneg %p34
      %p41 = scmp.eq.s32.totalorder %s11, 3
      %p42 = por %p40, %p41
      %p43 = scmp.ne.s32.totalorder %s35, %s38
      %p44 = scmp.eq.s32.totalorder %s11, 0
      %p45 = por %p43, %p44
      %p46 = scmp.ne.s32.totalorder %s35, %s38
      %p47 = scmp.eq.s32.totalorder %s16, 3
      %p48 = por %p46, %p47
      %p49 = scmp.ne.s32.totalorder %s38, %s39
      %p50 = scmp.eq.s32.totalorder %s16, 0
      %p51 = por %p49, %p50
      %p52 = scmp.ne.s32.totalorder %s38, %s39
      %p53 = scmp.eq.s32.totalorder %s17, 3
      %p54 = por %p52, %p53
      %p56 = scmp.ne.s32.totalorder %s39, %s55
      %p57 = scmp.eq.s32.totalorder %s17, 0
      %p58 = por %p56, %p57
      %s60 = sadd.s32 %s59, 1
      %p63 = scmp.eq.s32.totalorder %s11, 3
      %p64 = scmp.ne.s32.totalorder %s59, %s61
      %p65 = scmp.eq.s32.totalorder %s11, 0
      %p66 = por %p64, %p65
      %p67 = scmp.ne.s32.totalorder %s59, %s61
      %p68 = scmp.eq.s32.totalorder %s16, 3
      %p69 = por %p67, %p68
      %p70 = scmp.ne.s32.totalorder %s61, %s62
      %p71 = scmp.eq.s32.totalorder %s16, 0
      %p72 = por %p70, %p71
      %p73 = scmp.ne.s32.totalorder %s61, %s62
      %p74 = scmp.eq.s32.totalorder %s17, 3
      %p75 = por %p73, %p74
      %p77 = scmp.ne.s32.totalorder %s62, %s76
      %p78 = scmp.eq.s32.totalorder %s17, 0
      %p79 = por %p77, %p78
      %s81 = sadd.s32 %s80, 1
      %p84 = scmp.eq.s32.totalorder %s11, 3
      %p85 = scmp.ne.s32.totalorder %s80, %s82
      %p86 = scmp.eq.s32.totalorder %s11, 0
      %p87 = por %p85, %p86
      %p88 = scmp.ne.s32.totalorder %s80, %s82
      %p89 = scmp.eq.s32.totalorder %s16, 3
      %p90 = por %p88, %p89
      %p91 = scmp.ne.s32.totalorder %s82, %s83
      %p92 = scmp.eq.s32.totalorder %s16, 0
      %p93 = por %p91, %p92
      %p94 = scmp.ne.s32.totalorder %s82, %s83
      %p95 = scmp.eq.s32.totalorder %s17, 3
      %p96 = por %p94, %p95
      %p98 = scmp.ne.s32.totalorder %s83, %s97
      %p99 = scmp.eq.s32.totalorder %s17, 0
      %p100 = por %p98, %p99
      %s102 = sadd.s32 %s101, 1
      %p105 = scmp.eq.s32.totalorder %s11, 3
      %p106 = scmp.ne.s32.totalorder %s101, %s103
      %p107 = scmp.eq.s32.totalorder %s11, 0
      %p108 = por %p106, %p107
      %p109 = scmp.ne.s32.totalorder %s101, %s103
      %p110 = scmp.eq.s32.totalorder %s16, 3
      %p111 = por %p109, %p110
      %p112 = scmp.ne.s32.totalorder %s103, %s104
      %p113 = scmp.eq.s32.totalorder %s16, 0
      %p114 = por %p112, %p113
      %p115 = scmp.ne.s32.totalorder %s103, %s104
      %p116 = scmp.eq.s32.totalorder %s17, 3
      %p117 = por %p115, %p116
      %p119 = scmp.ne.s32.totalorder %s104, %s118
      %p120 = scmp.eq.s32.totalorder %s17, 0
      %p121 = por %p119, %p120
      %s123 = sadd.s32 %s122, 1
      %p126 = scmp.eq.s32.totalorder %s11, 3
      %p127 = scmp.ne.s32.totalorder %s122, %s124
      %p128 = scmp.eq.s32.totalorder %s11, 0
      %p129 = por %p127, %p128
      %p130 = scmp.ne.s32.totalorder %s122, %s124
      %p131 = scmp.eq.s32.totalorder %s16, 3
      %p132 = por %p130, %p131
      %p133 = scmp.ne.s32.totalorder %s124, %s125
      %p134 = scmp.eq.s32.totalorder %s16, 0
      %p135 = por %p133, %p134
      %p136 = scmp.ne.s32.totalorder %s124, %s125
      %p137 = scmp.eq.s32.totalorder %s17, 3
      %p138 = por %p136, %p137
      %p140 = scmp.ne.s32.totalorder %s125, %s139
      %p141 = scmp.eq.s32.totalorder %s17, 0
      %p142 = por %p140, %p141
      %s143 = ssub.s32 %s18, %s30
      %s144 = ssub.s32 %s19, %s26
      %s145 = sor.u32 %s143, %s144
      %p146 = scmp.eq.s32.totalorder %s145, 0
      %s148 = sadd.s32 %s147, 1
      %s149 = scalar_select %p146, %s147, %s148
      %p152 = pneg %p146
      %p153 = scmp.eq.s32.totalorder %s11, 3
      %p154 = por %p152, %p153
      %p155 = scmp.ne.s32.totalorder %s147, %s150
      %p156 = scmp.eq.s32.totalorder %s11, 0
      %p157 = por %p155, %p156
      %p158 = scmp.ne.s32.totalorder %s147, %s150
      %p159 = scmp.eq.s32.totalorder %s16, 3
      %p160 = por %p158, %p159
      %p161 = scmp.ne.s32.totalorder %s150, %s151
      %p162 = scmp.eq.s32.totalorder %s16, 0
      %p163 = por %p161, %p162
      %p164 = scmp.ne.s32.totalorder %s150, %s151
      %p165 = scmp.eq.s32.totalorder %s17, 3
      %p166 = por %p164, %p165
      %p168 = scmp.ne.s32.totalorder %s151, %s167
      %p169 = scmp.eq.s32.totalorder %s17, 0
      %p170 = por %p168, %p169
      %p171 = scmp.le.s32.totalorder 1, %s11
      %p172 = scmp.lt.s32.totalorder %s11, 5
      %p173 = pnand %p171, %p172
      %p174 = pneg %p173
      // Predicated region
      $region9: #{tpu_custom_call.1} parent=5 // pred_check
        _
      $region10: #{tpu_custom_call.1} parent=5 // pred_check_branch
        %176 = sbr.rel (%p173) target = $region12
      $region11: #{tpu_custom_call.1} parent=5 // pred_region
        %s177 = ssub.s32 %s11, 1
        // Predicated region
        $region13: #{tpu_custom_call.1} parent=11 // pred_check
          %p178 = pneg %p72
        $region14: #{tpu_custom_call.1} parent=11 // pred_check_branch
          %180 = sbr.rel (%p178) target = $region16
        $region15: #{tpu_custom_call.1} parent=11 // pred_region
          _
        $region16: #{tpu_custom_call.1} parent=11 // pred_fallthru
          _
        // Predicated region
        $region17: #{tpu_custom_call.1} parent=11 // pred_check
          %p181 = pneg %p93
        $region18: #{tpu_custom_call.1} parent=11 // pred_check_branch
          %183 = sbr.rel (%p181) target = $region20
        $region19: #{tpu_custom_call.1} parent=11 // pred_region
          _
        $region20: #{tpu_custom_call.1} parent=11 // pred_fallthru
          _
        // Predicated region
        $region21: #{tpu_custom_call.1} parent=11 // pred_check
          %p184 = pneg %p114
        $region22: #{tpu_custom_call.1} parent=11 // pred_check_branch
          %186 = sbr.rel (%p184) target = $region24
        $region23: #{tpu_custom_call.1} parent=11 // pred_region
          _
        $region24: #{tpu_custom_call.1} parent=11 // pred_fallthru
          _
        // Predicated region
        $region25: #{tpu_custom_call.1} parent=11 // pred_check
          %p187 = pneg %p135
        $region26: #{tpu_custom_call.1} parent=11 // pred_check_branch
          %189 = sbr.rel (%p187) target = $region28
        $region27: #{tpu_custom_call.1} parent=11 // pred_region
          _
        $region28: #{tpu_custom_call.1} parent=11 // pred_fallthru
          _
      $region12: #{tpu_custom_call.1} parent=5 // pred_fallthru
        _
      %p190 = scmp.lt.s32.totalorder %s11, 4
      // Predicated region
      $region29: #{tpu_custom_call.1} parent=5 // pred_check
        %p191 = pneg %p190
      $region30: #{tpu_custom_call.1} parent=5 // pred_check_branch
        %193 = sbr.rel (%p191) target = $region32
      $region31: #{tpu_custom_call.1} parent=5 // pred_region
        // Predicated region
        $region33: #{tpu_custom_call.1} parent=31 // pred_check
          %p194 = pneg %p45
        $region34: #{tpu_custom_call.1} parent=31 // pred_check_branch
          %196 = sbr.rel (%p194) target = $region36
        $region35: #{tpu_custom_call.1} parent=31 // pred_region
          %s197 = sand.u32 %s35, 1
          %s198 = sand.u32 %s35, 1
          %s199 = smul.addr %s198, 32
          %s200 = scalar_lea.vmem [#allocation3], %s199
          %s201 = smul.u32 2, %s18
          %s202 = smul.u32 2, %s19
          %s203 = smul.addr %s201, 4
          %s204 = sadd.s32 %s202, %s203
          %s205 = smul.addr %s204, 8
          %s206 = scalar_lea.vmem %s0, %s205
          // Predicated region
          $region37: #{tpu_custom_call.1} parent=35 // pred_check
            _
          $region38: #{tpu_custom_call.1} parent=35 // pred_check_branch
            %208 = sbr.rel (0) target = $region40
          $region39: #{tpu_custom_call.1} parent=35 // pred_region
            // Predicated region
            $region41: #{tpu_custom_call.1} parent=39 // pred_check
              _
            $region42: #{tpu_custom_call.1} parent=39 // pred_check_branch
              %210 = sbr.rel (0) target = $region44
            $region43: #{tpu_custom_call.1} parent=39 // pred_region
              // Predicated region
              $region56: #{tpu_custom_call.1} parent=43 // pred_check
                _
              $region57: #{tpu_custom_call.1} parent=43 // pred_check_branch
                %231 = sbr.rel (0) target = $region59
              $region58: #{tpu_custom_call.1} parent=43 // pred_region
                loop: start=0, step=1, limit=1
                $region60: #{tpu_custom_call.1} parent=58 // loop_pre_header
                  _
                $region61: #{tpu_custom_call.1} parent=58 // loop_header
                  %s233 = sphi 0, %s237
                  %p234 = scmp.ge.s32.totalorder %s233, 1
                  %s238 = sphi %s206, %s206
                  %s239 = sphi %s200, %s200
                $region62: #{tpu_custom_call.1} parent=58 // loop_header_branch
                  %236 = sbr.rel (%p234) target = $region66
                $region63: #{tpu_custom_call.1} parent=58 // loop_body
                  %v240 = vld [vmem:[%s238] sm:$0xff]
                  %241 = vst [vmem:[%s239] sm:$0xff] %v240
                  %v242 = vld [vmem:[%s238 + $0x8] sm:$0xff]
                  %243 = vst [vmem:[%s239 + $0x8] sm:$0xff] %v242
                  %v244 = vld [vmem:[%s238 + $0x20] sm:$0xff]
                  %245 = vst [vmem:[%s239 + $0x10] sm:$0xff] %v244
                  %v246 = vld [vmem:[%s238 + $0x28] sm:$0xff]
                  %247 = vst [vmem:[%s239 + $0x18] sm:$0xff] %v246
                $region64: #{tpu_custom_call.1} parent=58 // loop_footer
                  %s237 = sadd.s32 1, %s233
                $region65: #{tpu_custom_call.1} parent=58 // loop_footer_branch
                  %232 = sbr.rel target = $region61
                $region66: #{tpu_custom_call.1} parent=58 // loop_exit
                  _
              $region59: #{tpu_custom_call.1} parent=43 // pred_fallthru
                _
              // Predicated region
              $region67: #{tpu_custom_call.1} parent=43 // pred_check
                _
              $region68: #{tpu_custom_call.1} parent=43 // pred_check_branch
                %249 = sbr.rel target = $region70
              $region69: #{tpu_custom_call.1} parent=43 // pred_region
                _
              $region70: #{tpu_custom_call.1} parent=43 // pred_fallthru
                _
            $region44: #{tpu_custom_call.1} parent=39 // pred_fallthru
              _
            // Predicated region
            $region45: #{tpu_custom_call.1} parent=39 // pred_check
              _
            $region46: #{tpu_custom_call.1} parent=39 // pred_check_branch
              %212 = sbr.rel target = $region48
            $region47: #{tpu_custom_call.1} parent=39 // pred_region
              loop: start=0, step=1, limit=1
              $region49: #{tpu_custom_call.1} parent=47 // loop_pre_header
                _
              $region50: #{tpu_custom_call.1} parent=47 // loop_header
                %s215 = sphi 0, %s219
                %p216 = scmp.ge.s32.totalorder %s215, 1
                %s220 = sphi %s206, %s206
                %s221 = sphi %s200, %s200
              $region51: #{tpu_custom_call.1} parent=47 // loop_header_branch
                %218 = sbr.rel (%p216) target = $region55
              $region52: #{tpu_custom_call.1} parent=47 // loop_body
                %v222 = vld [vmem:[%s220] sm:$0xff]
                %223 = vst [vmem:[%s221] sm:$0xff] %v222
                %v224 = vld [vmem:[%s220 + $0x8] sm:$0xff]
                %225 = vst [vmem:[%s221 + $0x8] sm:$0xff] %v224
                %v226 = vld [vmem:[%s220 + $0x20] sm:$0xff]
                %227 = vst [vmem:[%s221 + $0x10] sm:$0xff] %v226
                %v228 = vld [vmem:[%s220 + $0x28] sm:$0xff]
                %229 = vst [vmem:[%s221 + $0x18] sm:$0xff] %v228
              $region53: #{tpu_custom_call.1} parent=47 // loop_footer
                %s219 = sadd.s32 1, %s215
              $region54: #{tpu_custom_call.1} parent=47 // loop_footer_branch
                %214 = sbr.rel target = $region50
              $region55: #{tpu_custom_call.1} parent=47 // loop_exit
                _
            $region48: #{tpu_custom_call.1} parent=39 // pred_fallthru
              _
          $region40: #{tpu_custom_call.1} parent=35 // pred_fallthru
            _
          %250 = vnop
        $region36: #{tpu_custom_call.1} parent=31 // pred_fallthru
          _
      $region32: #{tpu_custom_call.1} parent=5 // pred_fallthru
        _
      %p251 = scmp.le.s32.totalorder 1, %s11
      %p252 = scmp.lt.s32.totalorder %s11, 5
      %p253 = pnand %p251, %p252
      %p254 = pneg %p253
      // Predicated region
      $region71: #{tpu_custom_call.1} parent=5 // pred_check
        _
      $region72: #{tpu_custom_call.1} parent=5 // pred_check_branch
        %256 = sbr.rel (%p253) target = $region74
      $region73: #{tpu_custom_call.1} parent=5 // pred_region
        %s257 = ssub.s32 %s11, 1
        %s258 = sand.u32 %s38, 1
        %s259 = sand.u32 %s38, 1
        %s260 = smul.addr %s259, 32
        %s261 = scalar_lea.vmem [#allocation3], %s260
        // Predicated region
        $region75: #{tpu_custom_call.1} parent=73 // pred_check
          %p262 = pneg %p51
        $region76: #{tpu_custom_call.1} parent=73 // pred_check_branch
          %264 = sbr.rel (%p262) target = $region78
        $region77: #{tpu_custom_call.1} parent=73 // pred_region
          _
        $region78: #{tpu_custom_call.1} parent=73 // pred_fallthru
          _
        %s265 = sand.u32 %s38, 1
        %s266 = sand.u32 %s38, 1
        %s267 = smul.addr %s266, 32
        %s268 = scalar_lea.vmem [#allocation3], %s267
        %p269 = pneg %p51
        %p270 = pneg %p48
        %p271 = pneg %p72
        %p272 = pneg %p69
        %p273 = pneg %p93
        %p274 = pneg %p90
        %p275 = pneg %p114
        %p276 = pneg %p111
        %p277 = pneg %p135
        %p278 = pneg %p132
        %p279 = pneg %p163
        %p280 = pneg %p160
        %s281 = sand.u32 %s150, 1
        %s282 = sand.u32 %s150, 1
        %s283 = smul.addr %s282, 32
        %s284 = scalar_lea.vmem [#allocation4], %s283
        %s285 = smul.u32 2, %s20
        %s286 = smul.u32 2, %s21
        %s287 = smul.u32 2, %s20
        %s288 = smul.u32 2, %s21
        %p289 = scmp.eq.s32.totalorder %s21, 0
        // Predicated region
        $region79: #{tpu_custom_call.1} parent=73 // pred_check
          %p290 = pneg %p289
        $region80: #{tpu_custom_call.1} parent=73 // pred_check_branch
          %292 = sbr.rel (%p290) target = $region82
        $region81: #{tpu_custom_call.1} parent=73 // pred_region
          %vm293 = vcmask 125952
          %294 = vst.msk [vmem:[#allocation2] sm:$0xf] %vm293, 0.0
          %295 = vst.msk [vmem:[#allocation2 + $0x18] sm:$0xf] %vm293, 0.0
        $region82: #{tpu_custom_call.1} parent=73 // pred_fallthru
          _
        %v296 = vld [vmem:[%s261] sm:$0xff]
        %v297 = vld [vmem:[%s261 + $0x8] sm:$0xff]
        %v298 = vld [vmem:[%s261 + $0x10] sm:$0xff]
        %v299 = vld [vmem:[%s261 + $0x18] sm:$0xff]
        %v300 = vld [vmem:[%s1] sm:$0xff]
        %v301 = vld [vmem:[%s1 + $0x8] sm:$0xff]
        %v302 = vld [vmem:[%s2] sm:$0x1]
        %v304 = vlaneseq
        %v305 = vshrl.u32 %v304, 7
        %v306 = vsub.s32 0, %v305
        %v307 = vrot.slane %v302, %v306
        %vm309 = vcmask 130048
        %v311 = vsel %vm309, %v296, 0
        %v314 = vsel %vm309, %v297, 0
        %v317 = vsel %vm309, %v298, 0
        %v320 = vsel %vm309, %v299, 0
        %322 = vmatprep.subr.mxu0 0.0
        %323 = vmatpush1.msra.mxu0 %v300
        %324 = vmatprep.subr.mxu0 0.0
        %325 = vmatpush1.msra.mxu0 %v301
        %326 = vmatprep.subr.mxu0 0.0
        %327 = vmatpush1.msra.mxu0 0.0
        %328 = vmatprep.subr.mxu0 0.0
        %329 = vmatpush1.msra.mxu0 0.0
        %330 = vmatprep.subr.mxu0 0.0
        %331 = vmatpush1.msra.mxu0 0.0
        %332 = vmatprep.subr.mxu0 0.0
        %333 = vmatpush1.msra.mxu0 0.0
        %334 = vmatprep.subr.mxu0 0.0
        %335 = vmatpush1.msra.mxu0 0.0
        %336 = vmatprep.subr.mxu0 0.0
        %337 = vmatpush1.msra.mxu0 0.0
        %338 = vmatprep.subr.mxu0 0.0
        %339 = vmatpush1.msra.mxu0 0.0
        %340 = vmatprep.subr.mxu0 0.0
        %341 = vmatpush1.msra.mxu0 0.0
        %342 = vmatprep.subr.mxu0 0.0
        %343 = vmatpush1.msra.mxu0 0.0
        %344 = vmatprep.subr.mxu0 0.0
        %345 = vmatpush1.msra.mxu0 0.0
        %346 = vmatprep.subr.mxu0 0.0
        %347 = vmatpush1.msra.mxu0 0.0
        %348 = vmatprep.subr.mxu0 0.0
        %349 = vmatpush1.msra.mxu0 0.0
        %350 = vmatprep.subr.mxu0 0.0
        %351 = vmatpush1.msra.mxu0 0.0
        %352 = vmatprep.subr.mxu0 0.0
        %353 = vmatpush1.msra.mxu0 0.0
        %354 = vmatprep.subr.mxu0 0.0
        %355 = vmatpush1.msra.mxu0 0.0
        %356 = vmatprep.subr.mxu0 0.0
        %357 = vmatpush1.msra.mxu0 0.0
        %358 = vmatprep.subr.mxu0 0.0
        %359 = vmatpush1.msra.mxu0 0.0
        %360 = vmatprep.subr.mxu0 0.0
        %361 = vmatpush1.msra.mxu0 0.0
        %362 = vmatprep.subr.mxu0 0.0
        %363 = vmatpush1.msra.mxu0 0.0
        %364 = vmatprep.subr.mxu0 0.0
        %365 = vmatpush1.msra.mxu0 0.0
        %366 = vmatprep.subr.mxu0 0.0
        %367 = vmatpush1.msra.mxu0 0.0
        %368 = vmatprep.subr.mxu0 0.0
        %369 = vmatpush1.msra.mxu0 0.0
        %370 = vmatprep.subr.mxu0 0.0
        %371 = vmatpush1.msra.mxu0 0.0
        %372 = vmatprep.subr.mxu0 0.0
        %373 = vmatpush1.msra.mxu0 0.0
        %374 = vmatprep.subr.mxu0 0.0
        %375 = vmatpush1.msra.mxu0 0.0
        %376 = vmatprep.subr.mxu0 0.0
        %377 = vmatpush1.msra.mxu0 0.0
        %378 = vmatprep.subr.mxu0 0.0
        %379 = vmatpush1.msra.mxu0 0.0
        %380 = vmatprep.subr.mxu0 0.0
        %381 = vmatpush1.msra.mxu0 0.0
        %382 = vmatprep.subr.mxu0 0.0
        %383 = vmatpush1.msra.mxu0 0.0
        %384 = vmatprep.subr.mxu0 0.0
        %385 = vmatpush1.msra.mxu0 0.0
        %386 = vmatprep.mubr.f32.mxu0 0.0
        %387 = vmatmul.mubr.f32.gmra.mrb[0].mxu0 %v311
        %v388 = vpop.f32.mrb[0].mxu0
        %v389 = vadd.f32 %v307, %v388
        %v390 = vpop.f32.mrb[0].mxu0
        %391 = vmatprep.mubr.f32.mxu0 0.0
        %392 = vmatmul.mubr.f32.gmra.mrb[0].mxu0 %v314
        %v393 = vpop.f32.mrb[0].mxu0
        %v394 = vadd.f32 %v307, %v393
        %v395 = vpop.f32.mrb[0].mxu0
        %396 = vmatprep.mubr.f32.mxu0 0.0
        %397 = vmatmul.mubr.f32.gmra.mrb[0].mxu0 %v317
        %v398 = vpop.f32.mrb[0].mxu0
        %v399 = vadd.f32 %v307, %v398
        %v400 = vpop.f32.mrb[0].mxu0
        %401 = vmatprep.mubr.f32.mxu0 0.0
        %402 = vmatmul.mubr.f32.gmra.mrb[0].mxu0 %v320
        %v403 = vpop.f32.mrb[0].mxu0
        %v404 = vadd.f32 %v307, %v403
        %v405 = vpop.f32.mrb[0].mxu0
        %406 = vdwg.mxu0
        %v407 = vmax.f32 %v389, 0.0
        %v408 = vmax.f32 %v394, 0.0
        %v409 = vmax.f32 %v399, 0.0
        %v410 = vmax.f32 %v404, 0.0
        %v411 = vld [vmem:[%s3] sm:$0xff]
        %v412 = vld [vmem:[%s3 + $0x8] sm:$0xff]
        %v413 = vld [vmem:[%s3 + $0x10] sm:$0xff]
        %v414 = vld [vmem:[%s3 + $0x18] sm:$0xff]
        %vm415 = vcmask 261120
        %v417 = vsel %vm415, %v407, 0
        %v420 = vsel %vm415, %v408, 0
        %v423 = vsel %vm415, %v409, 0
        %v426 = vsel %vm415, %v410, 0
        %428 = vmatprep.subr.mxu0 0.0
        %429 = vmatpush1.msra.mxu0 %v411
        %430 = vmatprep.subr.mxu0 0.0
        %431 = vmatpush1.msra.mxu0 %v412
        %432 = vmatprep.subr.mxu0 0.0
        %433 = vmatpush1.msra.mxu0 %v413
        %434 = vmatprep.subr.mxu0 0.0
        %435 = vmatpush1.msra.mxu0 %v414
        %436 = vmatprep.subr.mxu0 0.0
        %437 = vmatpush1.msra.mxu0 0.0
        %438 = vmatprep.subr.mxu0 0.0
        %439 = vmatpush1.msra.mxu0 0.0
        %440 = vmatprep.subr.mxu0 0.0
        %441 = vmatpush1.msra.mxu0 0.0
        %442 = vmatprep.subr.mxu0 0.0
        %443 = vmatpush1.msra.mxu0 0.0
        %444 = vmatprep.subr.mxu0 0.0
        %445 = vmatpush1.msra.mxu0 0.0
        %446 = vmatprep.subr.mxu0 0.0
        %447 = vmatpush1.msra.mxu0 0.0
        %448 = vmatprep.subr.mxu0 0.0
        %449 = vmatpush1.msra.mxu0 0.0
        %450 = vmatprep.subr.mxu0 0.0
        %451 = vmatpush1.msra.mxu0 0.0
        %452 = vmatprep.subr.mxu0 0.0
        %453 = vmatpush1.msra.mxu0 0.0
        %454 = vmatprep.subr.mxu0 0.0
        %455 = vmatpush1.msra.mxu0 0.0
        %456 = vmatprep.subr.mxu0 0.0
        %457 = vmatpush1.msra.mxu0 0.0
        %458 = vmatprep.subr.mxu0 0.0
        %459 = vmatpush1.msra.mxu0 0.0
        %460 = vmatprep.subr.mxu0 0.0
        %461 = vmatpush1.msra.mxu0 0.0
        %462 = vmatprep.subr.mxu0 0.0
        %463 = vmatpush1.msra.mxu0 0.0
        %464 = vmatprep.subr.mxu0 0.0
        %465 = vmatpush1.msra.mxu0 0.0
        %466 = vmatprep.subr.mxu0 0.0
        %467 = vmatpush1.msra.mxu0 0.0
        %468 = vmatprep.subr.mxu0 0.0
        %469 = vmatpush1.msra.mxu0 0.0
        %470 = vmatprep.subr.mxu0 0.0
        %471 = vmatpush1.msra.mxu0 0.0
        %472 = vmatprep.subr.mxu0 0.0
        %473 = vmatpush1.msra.mxu0 0.0
        %474 = vmatprep.subr.mxu0 0.0
        %475 = vmatpush1.msra.mxu0 0.0
        %476 = vmatprep.subr.mxu0 0.0
        %477 = vmatpush1.msra.mxu0 0.0
        %478 = vmatprep.subr.mxu0 0.0
        %479 = vmatpush1.msra.mxu0 0.0
        %480 = vmatprep.subr.mxu0 0.0
        %481 = vmatpush1.msra.mxu0 0.0
        %482 = vmatprep.subr.mxu0 0.0
        %483 = vmatpush1.msra.mxu0 0.0
        %484 = vmatprep.subr.mxu0 0.0
        %485 = vmatpush1.msra.mxu0 0.0
        %486 = vmatprep.subr.mxu0 0.0
        %487 = vmatpush1.msra.mxu0 0.0
        %488 = vmatprep.subr.mxu0 0.0
        %489 = vmatpush1.msra.mxu0 0.0
        %490 = vmatprep.subr.mxu0 0.0
        %491 = vmatpush1.msra.mxu0 0.0
        %492 = vmatprep.mubr.f32.mxu0 0.0
        %493 = vmatmul.mubr.f32.gmra.mrb[0].mxu0 %v417
        %v494 = vpop.f32.mrb[0].mxu0
        %v495 = vadd.f32 0.0, %v494
        %v496 = vpop.f32.mrb[0].mxu0
        %497 = vmatprep.mubr.f32.mxu0 0.0
        %498 = vmatmul.mubr.f32.gmra.mrb[0].mxu0 %v420
        %v499 = vpop.f32.mrb[0].mxu0
        %v500 = vadd.f32 0.0, %v499
        %v501 = vpop.f32.mrb[0].mxu0
        %502 = vmatprep.mubr.f32.mxu0 0.0
        %503 = vmatmul.mubr.f32.gmra.mrb[0].mxu0 %v423
        %v504 = vpop.f32.mrb[0].mxu0
        %v505 = vadd.f32 0.0, %v504
        %v506 = vpop.f32.mrb[0].mxu0
        %507 = vmatprep.mubr.f32.mxu0 0.0
        %508 = vmatmul.mubr.f32.gmra.mrb[0].mxu0 %v426
        %v509 = vpop.f32.mrb[0].mxu0
        %v510 = vadd.f32 0.0, %v509
        %v511 = vpop.f32.mrb[0].mxu0
        %512 = vdwg.mxu0
        %513 = vst.msk [vmem:[#allocation2 + $0x4] sm:$0xff] %vm309, %v495
        %514 = vst.msk [vmem:[#allocation2 + $0xc] sm:$0xff] %vm309, %v500
        %515 = vst.msk [vmem:[#allocation2 + $0x1c] sm:$0xff] %vm309, %v505
        %516 = vst.msk [vmem:[#allocation2 + $0x24] sm:$0xff] %vm309, %v510
        %v517 = vld [vmem:[%s4] sm:$0x1f]
        %v518 = vlaneseq
        %v519 = vshrl.u32 %v518, 7
        %v520 = vsub.s32 4, %v519
        %v521 = vrot.slane %v517, %v520
        %v522 = vmul.f32 %v521, %v495
        %v523 = vmul.f32 %v521, %v500
        %v524 = vmul.f32 %v521, %v505
        %v525 = vmul.f32 %v521, %v510
        %v526 = vld [vmem:[#allocation2] sm:$0xff]
        %v527 = vld [vmem:[#allocation2 + $0x8] sm:$0xff]
        %v528 = vld [vmem:[#allocation2 + $0x18] sm:$0xff]
        %v529 = vld [vmem:[#allocation2 + $0x20] sm:$0xff]
        %v530 = vlaneseq
        %v531 = vshrl.u32 %v530, 7
        %v532 = vsub.s32 0, %v531
        %v533 = vrot.slane %v517, %v532
        %v534 = vmul.f32 %v533, %v526
        %v535 = vmul.f32 %v533, %v527
        %v536 = vmul.f32 %v533, %v528
        %v537 = vmul.f32 %v533, %v529
        %v538 = vadd.f32 %v522, %v534
        %v539 = vadd.f32 %v523, %v535
        %v540 = vadd.f32 %v524, %v536
        %v541 = vadd.f32 %v525, %v537
        %v542 = vld [vmem:[#allocation2 + $0x1] sm:$0xff]
        %v543 = vld [vmem:[#allocation2 + $0x9] sm:$0xff]
        %v544 = vld [vmem:[#allocation2 + $0x19] sm:$0xff]
        %v545 = vld [vmem:[#allocation2 + $0x21] sm:$0xff]
        %v546 = vlaneseq
        %v547 = vshrl.u32 %v546, 7
        %v548 = vsub.s32 1, %v547
        %v549 = vrot.slane %v517, %v548
        %v550 = vmul.f32 %v549, %v542
        %v551 = vmul.f32 %v549, %v543
        %v552 = vmul.f32 %v549, %v544
        %v553 = vmul.f32 %v549, %v545
        %v554 = vadd.f32 %v538, %v550
        %v555 = vadd.f32 %v539, %v551
        %v556 = vadd.f32 %v540, %v552
        %v557 = vadd.f32 %v541, %v553
        %v558 = vld [vmem:[#allocation2 + $0x2] sm:$0xff]
        %v559 = vld [vmem:[#allocation2 + $0xa] sm:$0xff]
        %v560 = vld [vmem:[#allocation2 + $0x1a] sm:$0xff]
        %v561 = vld [vmem:[#allocation2 + $0x22] sm:$0xff]
        %v562 = vlaneseq
        %v563 = vshrl.u32 %v562, 7
        %v564 = vsub.s32 2, %v563
        %v565 = vrot.slane %v517, %v564
        %v566 = vmul.f32 %v565, %v558
        %v567 = vmul.f32 %v565, %v559
        %v568 = vmul.f32 %v565, %v560
        %v569 = vmul.f32 %v565, %v561
        %v570 = vadd.f32 %v554, %v566
        %v571 = vadd.f32 %v555, %v567
        %v572 = vadd.f32 %v556, %v568
        %v573 = vadd.f32 %v557, %v569
        %v574 = vld [vmem:[#allocation2 + $0x3] sm:$0xff]
        %v575 = vld [vmem:[#allocation2 + $0xb] sm:$0xff]
        %v576 = vld [vmem:[#allocation2 + $0x1b] sm:$0xff]
        %v577 = vld [vmem:[#allocation2 + $0x23] sm:$0xff]
        %v578 = vlaneseq
        %v579 = vshrl.u32 %v578, 7
        %v580 = vsub.s32 3, %v579
        %v581 = vrot.slane %v517, %v580
        %v582 = vmul.f32 %v581, %v574
        %v583 = vmul.f32 %v581, %v575
        %v584 = vmul.f32 %v581, %v576
        %v585 = vmul.f32 %v581, %v577
        %v586 = vadd.f32 %v570, %v582
        %v587 = vadd.f32 %v571, %v583
        %v588 = vadd.f32 %v572, %v584
        %v589 = vadd.f32 %v573, %v585
        %v590 = vadd.f32 %v296, %v495
        %v591 = vadd.f32 %v297, %v500
        %v592 = vadd.f32 %v298, %v505
        %v593 = vadd.f32 %v299, %v510
        %v594 = vadd.f32 %v590, %v586
        %v595 = vadd.f32 %v591, %v587
        %v596 = vadd.f32 %v592, %v588
        %v597 = vadd.f32 %v593, %v589
        %598 = vst.msk [vmem:[%s284] sm:$0xff] %vm309, %v594
        %599 = vst.msk [vmem:[%s284 + $0x8] sm:$0xff] %vm309, %v595
        %600 = vst.msk [vmem:[%s284 + $0x10] sm:$0xff] %vm309, %v596
        %601 = vst.msk [vmem:[%s284 + $0x18] sm:$0xff] %vm309, %v597
        %v602 = vld [vmem:[#allocation2 + $0x10] sm:$0xf]
        %v603 = vld [vmem:[#allocation2 + $0x28] sm:$0xf]
        %vm604 = vcmask 125952
        %605 = vst.msk [vmem:[#allocation2] sm:$0xf] %vm604, %v602
        %606 = vst.msk [vmem:[#allocation2 + $0x18] sm:$0xf] %vm604, %v603
        %s607 = sand.u32 %s150, 1
        %s608 = sand.u32 %s150, 1
        %s609 = smul.addr %s608, 32
        %s610 = scalar_lea.vmem [#allocation4], %s609
        // Predicated region
        $region83: #{tpu_custom_call.1} parent=73 // pred_check
          %p611 = pneg %p160
        $region84: #{tpu_custom_call.1} parent=73 // pred_check_branch
          %613 = sbr.rel (%p611) target = $region86
        $region85: #{tpu_custom_call.1} parent=73 // pred_region
          %s614 = smul.u32 2, %s20
          %s615 = smul.u32 2, %s21
          %s616 = smul.addr %s614, 4
          %s617 = sadd.s32 %s615, %s616
          %s618 = smul.addr %s617, 8
          %s619 = scalar_lea.vmem %s5, %s618
          // Predicated region
          $region87: #{tpu_custom_call.1} parent=85 // pred_check
            _
          $region88: #{tpu_custom_call.1} parent=85 // pred_check_branch
            %621 = sbr.rel (0) target = $region90
          $region89: #{tpu_custom_call.1} parent=85 // pred_region
            // Predicated region
            $region91: #{tpu_custom_call.1} parent=89 // pred_check
              _
            $region92: #{tpu_custom_call.1} parent=89 // pred_check_branch
              %623 = sbr.rel (0) target = $region94
            $region93: #{tpu_custom_call.1} parent=89 // pred_region
              // Predicated region
              $region106: #{tpu_custom_call.1} parent=93 // pred_check
                _
              $region107: #{tpu_custom_call.1} parent=93 // pred_check_branch
                %644 = sbr.rel (0) target = $region109
              $region108: #{tpu_custom_call.1} parent=93 // pred_region
                loop: start=0, step=1, limit=1
                $region110: #{tpu_custom_call.1} parent=108 // loop_pre_header
                  _
                $region111: #{tpu_custom_call.1} parent=108 // loop_header
                  %s646 = sphi 0, %s650
                  %p647 = scmp.ge.s32.totalorder %s646, 1
                  %s651 = sphi %s610, %s610
                  %s652 = sphi %s619, %s619
                $region112: #{tpu_custom_call.1} parent=108 // loop_header_branch
                  %649 = sbr.rel (%p647) target = $region116
                $region113: #{tpu_custom_call.1} parent=108 // loop_body
                  %v653 = vld [vmem:[%s651] sm:$0xff]
                  %654 = vst [vmem:[%s652] sm:$0xff] %v653
                  %v655 = vld [vmem:[%s651 + $0x8] sm:$0xff]
                  %656 = vst [vmem:[%s652 + $0x8] sm:$0xff] %v655
                  %v657 = vld [vmem:[%s651 + $0x10] sm:$0xff]
                  %658 = vst [vmem:[%s652 + $0x20] sm:$0xff] %v657
                  %v659 = vld [vmem:[%s651 + $0x18] sm:$0xff]
                  %660 = vst [vmem:[%s652 + $0x28] sm:$0xff] %v659
                $region114: #{tpu_custom_call.1} parent=108 // loop_footer
                  %s650 = sadd.s32 1, %s646
                $region115: #{tpu_custom_call.1} parent=108 // loop_footer_branch
                  %645 = sbr.rel target = $region111
                $region116: #{tpu_custom_call.1} parent=108 // loop_exit
                  _
              $region109: #{tpu_custom_call.1} parent=93 // pred_fallthru
                _
              // Predicated region
              $region117: #{tpu_custom_call.1} parent=93 // pred_check
                _
              $region118: #{tpu_custom_call.1} parent=93 // pred_check_branch
                %662 = sbr.rel target = $region120
              $region119: #{tpu_custom_call.1} parent=93 // pred_region
                _
              $region120: #{tpu_custom_call.1} parent=93 // pred_fallthru
                _
            $region94: #{tpu_custom_call.1} parent=89 // pred_fallthru
              _
            // Predicated region
            $region95: #{tpu_custom_call.1} parent=89 // pred_check
              _
            $region96: #{tpu_custom_call.1} parent=89 // pred_check_branch
              %625 = sbr.rel target = $region98
            $region97: #{tpu_custom_call.1} parent=89 // pred_region
              loop: start=0, step=1, limit=1
              $region99: #{tpu_custom_call.1} parent=97 // loop_pre_header
                _
              $region100: #{tpu_custom_call.1} parent=97 // loop_header
                %s628 = sphi 0, %s632
                %p629 = scmp.ge.s32.totalorder %s628, 1
                %s633 = sphi %s610, %s610
                %s634 = sphi %s619, %s619
              $region101: #{tpu_custom_call.1} parent=97 // loop_header_branch
                %631 = sbr.rel (%p629) target = $region105
              $region102: #{tpu_custom_call.1} parent=97 // loop_body
                %v635 = vld [vmem:[%s633] sm:$0xff]
                %636 = vst [vmem:[%s634] sm:$0xff] %v635
                %v637 = vld [vmem:[%s633 + $0x8] sm:$0xff]
                %638 = vst [vmem:[%s634 + $0x8] sm:$0xff] %v637
                %v639 = vld [vmem:[%s633 + $0x10] sm:$0xff]
                %640 = vst [vmem:[%s634 + $0x20] sm:$0xff] %v639
                %v641 = vld [vmem:[%s633 + $0x18] sm:$0xff]
                %642 = vst [vmem:[%s634 + $0x28] sm:$0xff] %v641
              $region103: #{tpu_custom_call.1} parent=97 // loop_footer
                %s632 = sadd.s32 1, %s628
              $region104: #{tpu_custom_call.1} parent=97 // loop_footer_branch
                %627 = sbr.rel target = $region100
              $region105: #{tpu_custom_call.1} parent=97 // loop_exit
                _
            $region98: #{tpu_custom_call.1} parent=89 // pred_fallthru
              _
          $region90: #{tpu_custom_call.1} parent=85 // pred_fallthru
            _
          %663 = vnop
        $region86: #{tpu_custom_call.1} parent=73 // pred_fallthru
          _
      $region74: #{tpu_custom_call.1} parent=5 // pred_fallthru
        _
      %p664 = scmp.le.s32.totalorder 2, %s11
      // Predicated region
      $region121: #{tpu_custom_call.1} parent=5 // pred_check
        %p665 = pneg %p664
      $region122: #{tpu_custom_call.1} parent=5 // pred_check_branch
        %667 = sbr.rel (%p665) target = $region124
      $region123: #{tpu_custom_call.1} parent=5 // pred_region
        %s668 = ssub.s32 %s11, 2
        // Predicated region
        $region125: #{tpu_custom_call.1} parent=123 // pred_check
          %p669 = pneg %p166
        $region126: #{tpu_custom_call.1} parent=123 // pred_check_branch
          %671 = sbr.rel (%p669) target = $region128
        $region127: #{tpu_custom_call.1} parent=123 // pred_region
          %s672 = sand.u32 %s151, 1
          %s673 = sand.u32 %s151, 1
          %s674 = smul.addr %s673, 32
          %s675 = scalar_lea.vmem [#allocation4], %s674
        $region128: #{tpu_custom_call.1} parent=123 // pred_fallthru
          _
      $region124: #{tpu_custom_call.1} parent=5 // pred_fallthru
        _
    $region6: #{tpu_custom_call.1} parent=1 // loop_footer
      %s15 = sadd.s32 1, %s11
    $region7: #{tpu_custom_call.1} parent=1 // loop_footer_branch
      %10 = sbr.rel target = $region3
    $region8: #{tpu_custom_call.1} parent=1 // loop_exit
      _

</llo_original>
